<compile_context>
chip_gen: v5e
topology: v5e:2x2
jax: 0.10.0
libtpu: 0.0.40
codegen_flags: <defaults>
</compile_context>

<pallas_src>
import functools

import jax
import jax.numpy as jnp
from jax import lax
from jax.experimental import pallas as pl
from jax.experimental.pallas import tpu as pltpu


def _round_up(x, m):
    return (x + m - 1) // m * m


def _lane_fold(x, width):
    """Sum lane-aligned `width`-wide column chunks: (tm, tn) -> (tm, width).

    Pure VPU adds on lane-aligned slices (no cross-lane / XLU work).
    """
    tn = x.shape[-1]
    acc = x[:, :width]
    for c in range(1, tn // width):
        acc = acc + x[:, c * width:(c + 1) * width]
    return acc


def _supcon_tile_kernel(rows_ref, cols_ref, lrow_ref, lcol_ref, *out_refs,
                        temperature, neu_value, use_neu, n_valid, tm, tn,
                        fold_w, padded):
    if use_neu:
        pos_out, tot_out, neu_out = out_refs
    else:
        pos_out, tot_out = out_refs
        neu_out = None

    i = pl.program_id(0)
    j = pl.program_id(1)
    nj = pl.num_programs(1)

    # --- init accumulators (outputs stay VMEM-resident across the j axis) ----
    @pl.when(j == 0)
    def _():
        pos_out[...] = jnp.zeros_like(pos_out)
        tot_out[...] = jnp.zeros_like(tot_out)
        if use_neu:
            neu_out[...] = jnp.zeros_like(neu_out)

    # --- cosine tile: inputs already L2-normalized (and cast) in the wrapper.
    cos = lax.dot_general(rows_ref[...], cols_ref[...],
                          dimension_numbers=(((1,), (1,)), ((), ())),
                          preferred_element_type=jnp.float32)          # (tm, tn)

    # exp(((1+cos)/2 + eps)/T - (1+eps)/T) == exp((cos - 1) * 0.5/T).
    # The constant shift cancels in pos/(pos+neg) -> identical loss.
    e = jnp.exp((cos - 1.0) * (0.5 / temperature))

    # --- lane-dense accumulation; compare (tm,1) against (1,tn) directly -----
    same = lrow_ref[...] == lcol_ref[...]                              # (tm, tn) bool
    pos_out[...] += _lane_fold(jnp.where(same, e, 0.0), fold_w)
    tot_out[...] += _lane_fold(e, fold_w)

    if use_neu:
        row_not_neu = lrow_ref[...] != neu_value                       # (tm, 1)
        col_not_neu = lcol_ref[...] != neu_value                       # (1, tn)
        neu_x = row_not_neu != col_not_neu                             # XOR, broadcast
        neu_out[...] += _lane_fold(jnp.where(neu_x, e, 0.0), fold_w)

    # --- exact diagonal exclusion (reference zeroes it out of pos and neg) ---
    # Only tiles whose row/col ranges overlap can contain diagonal elements,
    # so this extra pass runs on ~1/nj of the grid steps.
    @pl.when((i * tm < (j + 1) * tn) & (j * tn < (i + 1) * tm))
    def _():
        gr = i * tm + lax.broadcasted_iota(jnp.int32, (tm, tn), 0)
        gc = j * tn + lax.broadcasted_iota(jnp.int32, (tm, tn), 1)
        d = _lane_fold(jnp.where(gr == gc, e, 0.0), fold_w)
        pos_out[...] -= d
        tot_out[...] -= d

    # --- padding correction: padded columns carry a label no valid row can
    # match, so only `tot` (and `neu`) need correcting, and padded columns
    # only live in the last column block.  Traced only if padding exists.
    if padded:
        @pl.when(j == nj - 1)
        def _():
            gc = j * tn + lax.broadcasted_iota(jnp.int32, (tm, tn), 1)
            pad = gc >= n_valid
            tot_out[...] -= _lane_fold(jnp.where(pad, e, 0.0), fold_w)
            if use_neu:
                row_not_neu = lrow_ref[...] != neu_value
                col_not_neu = lcol_ref[...] != neu_value
                neu_x = row_not_neu != col_not_neu
                neu_out[...] -= _lane_fold(jnp.where(neu_x & pad, e, 0.0), fold_w)


def supcon_loss(reps, labels, augmentation=None, aug_label=None, *,
                num_classes, temperature, neu_value, use_neu, prob,
                eps=1e-8, use_bf16_matmul=True):
    """JAX/Pallas equivalent of SupconLoss.forward."""
    # Optional augmentation concat (args.augment != '' path) in plain JAX.
    if augmentation is not None and augmentation.shape[0] > 1:
        reps = jnp.concatenate([reps, augmentation], axis=0)
        labels = jnp.concatenate([labels, aug_label], axis=0)

    reps = reps.astype(jnp.float32)
    labels = labels.astype(jnp.int32)
    N, D = reps.shape

    # L2-normalize once in f32 (matches F.cosine_similarity eps=1e-8), then
    # cast the normalized result only.  bf16 halves DMA + VMEM footprint.
    norm = jnp.sqrt(jnp.sum(reps * reps, axis=-1, keepdims=True))
    reps_n = reps / jnp.maximum(norm, 1e-8)
    mm_dtype = jnp.bfloat16 if use_bf16_matmul else jnp.float32
    reps_n = reps_n.astype(mm_dtype)

    # Tile sizes.  tm is always a multiple of tn; a larger row block stays
    # VMEM-resident across the inner j loop and divides the HBM re-read of the
    # column stream.  Capped so bf16 streams + temporaries stay well under
    # v7x's 64 MiB physical VMEM.
    if N >= 1024 and D <= 2048:
        tm, tn = 512, 256
    elif N >= 256:
        tm = tn = 256
    elif N >= 128:
        tm = tn = 128
    else:
        tm = tn = _round_up(N, 8)
    n_pad = _round_up(N, tm)
    fold_w = min(128, tn)
    padded = n_pad != N

    if padded:
        pad_label = jnp.min(labels) - 1          # never equal to any real label
        reps_p = jnp.zeros((n_pad, D), mm_dtype).at[:N].set(reps_n)
        labels_p = jnp.full((n_pad,), pad_label, jnp.int32).at[:N].set(labels)
    else:
        reps_p, labels_p = reps_n, labels

    lab_row = labels_p.reshape(n_pad, 1)   # labels[i] for row tiles
    lab_col = labels_p.reshape(1, n_pad)   # labels[j] for col tiles (lane-dense)

    kernel = functools.partial(
        _supcon_tile_kernel,
        temperature=float(temperature),
        neu_value=int(neu_value),
        use_neu=bool(use_neu),
        n_valid=int(N),
        tm=tm, tn=tn, fold_w=fold_w,
        padded=padded,
    )

    n_out = 3 if use_neu else 2
    part_shape = jax.ShapeDtypeStruct((n_pad, fold_w), jnp.float32)
    out_spec = pl.BlockSpec((tm, fold_w), lambda i, j: (i, 0))

    parts = pl.pallas_call(
        kernel,
        out_shape=(part_shape,) * n_out,
        grid_spec=pltpu.PrefetchScalarGridSpec(
            num_scalar_prefetch=0,
            grid=(n_pad // tm, n_pad // tn),
            in_specs=[
                pl.BlockSpec((tm, D), lambda i, j: (i, 0)),   # query rows
                pl.BlockSpec((tn, D), lambda i, j: (j, 0)),   # key rows (same array)
                pl.BlockSpec((tm, 1), lambda i, j: (i, 0)),   # row labels
                pl.BlockSpec((1, tn), lambda i, j: (0, j)),   # col labels
            ],
            out_specs=(out_spec,) * n_out,
        ),
        compiler_params=pltpu.CompilerParams(
            dimension_semantics=("parallel", "arbitrary"),    # megacore rows on v7x
            vmem_limit_bytes=48 * 1024 * 1024),
    )(reps_p, reps_p, lab_row, lab_col)

    # ----- O(N) epilogue in plain JAX (exact divisions, off the hot loop) ----
    pos_s = jnp.sum(parts[0][:N], axis=-1)          # sum of e over same-label, off-diag
    tot_s = jnp.sum(parts[1][:N], axis=-1)          # sum of e over all valid, off-diag
    den = tot_s                                     # == pos_sum + neg_sum (w/o neu)
    if use_neu:
        den = den + float(prob) * jnp.sum(parts[2][:N], axis=-1)

    # Per-row positive-pair count (excluding self) via an O(N) histogram.
    # Assumes labels lie in [0, num_classes), as in the reference usage.
    hist = jnp.zeros((int(num_classes),), jnp.float32).at[labels].add(1.0)
    pos_cnt = hist[labels] - 1.0

    probs = pos_s / den
    probs = probs / (pos_cnt + eps)
    per_row = -jnp.log(probs + eps)
    loss_mask = (per_row > 0.3).astype(jnp.float32)
    return jnp.sum(per_row * loss_mask) / (jnp.sum(loss_mask) + eps)


if __name__ == "__main__":
    key = jax.random.PRNGKey(0)
    k_reps, k_lab = jax.random.split(key)

    # Small shapes consistent with the module's forward: batch=8, hidden=32.
    batch, hidden = 8, 32
    num_classes = 4
    temp = 0.1
    neu_value = 1          # "neutral" class id
    prob = 0.5             # args.prob
    use_neu = True         # args.loss == 'neu'

    reps = jax.random.normal(k_reps, (batch, hidden), dtype=jnp.float32)
    labels = jax.random.randint(k_lab, (batch,), 0, num_classes, dtype=jnp.int32)

    loss = supcon_loss(
        reps, labels,
        num_classes=num_classes, temperature=temp, neu_value=neu_value,
        use_neu=use_neu, prob=prob,
    )
    jax.block_until_ready(loss)
    print("KERNEL_OK")
</pallas_src>

<mosaic_0001>
module attributes {stable_mosaic.version = 11 : i64} {
  func.func @_supcon_tile_kernel(%arg0: i32, %arg1: i32, %arg2: memref<8x32xbf16, #tpu.memory_space<vmem>>, %arg3: memref<8x32xbf16, #tpu.memory_space<vmem>>, %arg4: memref<8x1xi32, #tpu.memory_space<vmem>>, %arg5: memref<1x8xi32, #tpu.memory_space<vmem>>, %arg6: memref<8x8xf32, #tpu.memory_space<vmem>>, %arg7: memref<8x8xf32, #tpu.memory_space<vmem>>, %arg8: memref<8x8xf32, #tpu.memory_space<vmem>>) attributes {dimension_semantics = [#tpu.dimension_semantics<parallel>, #tpu.dimension_semantics<arbitrary>], iteration_bounds = array<i64: 1, 1>, scalar_prefetch = 0 : i64, scratch_operands = 0 : i64, tpu.core_type = #tpu.core_type<tc>, window_params = [{transform_indices = @transform_0, window_bounds = array<i64: 8, 32>}, {transform_indices = @transform_1, window_bounds = array<i64: 8, 32>}, {transform_indices = @transform_2, window_bounds = array<i64: 8, 1>}, {transform_indices = @transform_3, window_bounds = array<i64: 1, 8>}, {transform_indices = @transform_4, window_bounds = array<i64: 8, 8>}, {transform_indices = @transform_5, window_bounds = array<i64: 8, 8>}, {transform_indices = @transform_6, window_bounds = array<i64: 8, 8>}]} {
    %c0_i32 = arith.constant 0 : i32
    %0 = arith.cmpi eq, %arg1, %c0_i32 : i32
    %1 = arith.extui %0 : i1 to i32
    %c0_i32_0 = arith.constant 0 : i32
    %2 = arith.cmpi ne, %1, %c0_i32_0 : i32
    scf.if %2 {
      %cst_35 = arith.constant 0.000000e+00 : f32
      %51 = vector.broadcast %cst_35 : f32 to vector<8x8xf32>
      %c0_36 = arith.constant 0 : index
      %c0_37 = arith.constant 0 : index
      %52 = vector.load %arg6[%c0_36, %c0_37] : memref<8x8xf32, #tpu.memory_space<vmem>>, vector<8x8xf32>
      tpu.vector_store %arg6[%c0_36, %c0_37], %51 {strides = array<i32>} : memref<8x8xf32, #tpu.memory_space<vmem>>, vector<8x8xf32>,
      %cst_38 = arith.constant 0.000000e+00 : f32
      %53 = vector.broadcast %cst_38 : f32 to vector<8x8xf32>
      %c0_39 = arith.constant 0 : index
      %c0_40 = arith.constant 0 : index
      %54 = vector.load %arg7[%c0_39, %c0_40] : memref<8x8xf32, #tpu.memory_space<vmem>>, vector<8x8xf32>
      tpu.vector_store %arg7[%c0_39, %c0_40], %53 {strides = array<i32>} : memref<8x8xf32, #tpu.memory_space<vmem>>, vector<8x8xf32>,
      %cst_41 = arith.constant 0.000000e+00 : f32
      %55 = vector.broadcast %cst_41 : f32 to vector<8x8xf32>
      %c0_42 = arith.constant 0 : index
      %c0_43 = arith.constant 0 : index
      %56 = vector.load %arg8[%c0_42, %c0_43] : memref<8x8xf32, #tpu.memory_space<vmem>>, vector<8x8xf32>
      tpu.vector_store %arg8[%c0_42, %c0_43], %55 {strides = array<i32>} : memref<8x8xf32, #tpu.memory_space<vmem>>, vector<8x8xf32>,
    } else {
    }
    %c0 = arith.constant 0 : index
    %c0_1 = arith.constant 0 : index
    %3 = vector.load %arg2[%c0, %c0_1] : memref<8x32xbf16, #tpu.memory_space<vmem>>, vector<8x32xbf16>
    %c0_2 = arith.constant 0 : index
    %c0_3 = arith.constant 0 : index
    %4 = vector.load %arg3[%c0_2, %c0_3] : memref<8x32xbf16, #tpu.memory_space<vmem>>, vector<8x32xbf16>
    %cst = arith.constant dense<0.000000e+00> : vector<8x8xf32>
    %5 = tpu.matmul %3, %4, %cst {dimension_numbers = #tpu.dot_dimension_numbers<[1], [1], [0], [0], [0, 0, 1, 0], [], []>} : vector<8x32xbf16>, vector<8x32xbf16>, vector<8x8xf32> -> vector<8x8xf32>
    %cst_4 = arith.constant 1.000000e+00 : f32
    %6 = vector.broadcast %cst_4 : f32 to vector<8x8xf32>
    %7 = arith.subf %5, %6 : vector<8x8xf32>
    %cst_5 = arith.constant 5.000000e+00 : f32
    %8 = vector.broadcast %cst_5 : f32 to vector<8x8xf32>
    %9 = arith.mulf %7, %8 : vector<8x8xf32>
    %10 = math.exp %9 : vector<8x8xf32>
    %c0_6 = arith.constant 0 : index
    %c0_7 = arith.constant 0 : index
    %11 = vector.load %arg4[%c0_6, %c0_7] : memref<8x1xi32, #tpu.memory_space<vmem>>, vector<8x1xi32>
    %c0_8 = arith.constant 0 : index
    %c0_9 = arith.constant 0 : index
    %12 = vector.load %arg5[%c0_8, %c0_9] : memref<1x8xi32, #tpu.memory_space<vmem>>, vector<1x8xi32>
    %13 = vector.broadcast %11 : vector<8x1xi32> to vector<8x8xi32>
    %14 = vector.broadcast %12 : vector<1x8xi32> to vector<8x8xi32>
    %15 = arith.cmpi eq, %13, %14 : vector<8x8xi32>
    %c0_10 = arith.constant 0 : index
    %c0_11 = arith.constant 0 : index
    %16 = vector.load %arg6[%c0_10, %c0_11] : memref<8x8xf32, #tpu.memory_space<vmem>>, vector<8x8xf32>
    %cst_12 = arith.constant 0.000000e+00 : f32
    %17 = vector.broadcast %cst_12 : f32 to vector<8x8xf32>
    %18 = arith.select %15, %10, %17 : vector<8x8xi1>, vector<8x8xf32>
    %19 = arith.addf %16, %18 : vector<8x8xf32>
    %c0_13 = arith.constant 0 : index
    %c0_14 = arith.constant 0 : index
    %20 = vector.load %arg6[%c0_13, %c0_14] : memref<8x8xf32, #tpu.memory_space<vmem>>, vector<8x8xf32>
    tpu.vector_store %arg6[%c0_13, %c0_14], %19 {strides = array<i32>} : memref<8x8xf32, #tpu.memory_space<vmem>>, vector<8x8xf32>,
    %c0_15 = arith.constant 0 : index
    %c0_16 = arith.constant 0 : index
    %21 = vector.load %arg7[%c0_15, %c0_16] : memref<8x8xf32, #tpu.memory_space<vmem>>, vector<8x8xf32>
    %22 = arith.addf %21, %10 : vector<8x8xf32>
    %c0_17 = arith.constant 0 : index
    %c0_18 = arith.constant 0 : index
    %23 = vector.load %arg7[%c0_17, %c0_18] : memref<8x8xf32, #tpu.memory_space<vmem>>, vector<8x8xf32>
    tpu.vector_store %arg7[%c0_17, %c0_18], %22 {strides = array<i32>} : memref<8x8xf32, #tpu.memory_space<vmem>>, vector<8x8xf32>,
    %c0_19 = arith.constant 0 : index
    %c0_20 = arith.constant 0 : index
    %24 = vector.load %arg4[%c0_19, %c0_20] : memref<8x1xi32, #tpu.memory_space<vmem>>, vector<8x1xi32>
    %c1_i32 = arith.constant 1 : i32
    %25 = vector.broadcast %c1_i32 : i32 to vector<8x1xi32>
    %26 = arith.cmpi ne, %24, %25 : vector<8x1xi32>
    %c0_21 = arith.constant 0 : index
    %c0_22 = arith.constant 0 : index
    %27 = vector.load %arg5[%c0_21, %c0_22] : memref<1x8xi32, #tpu.memory_space<vmem>>, vector<1x8xi32>
    %c1_i32_23 = arith.constant 1 : i32
    %28 = vector.broadcast %c1_i32_23 : i32 to vector<1x8xi32>
    %29 = arith.cmpi ne, %27, %28 : vector<1x8xi32>
    %30 = vector.broadcast %26 : vector<8x1xi1> to vector<8x8xi1>
    %31 = vector.broadcast %29 : vector<1x8xi1> to vector<8x8xi1>
    %32 = vector.broadcast %30 : vector<8x8xi1> to vector<8x8xi1>
    %33 = vector.broadcast %31 : vector<8x8xi1> to vector<8x8xi1>
    %34 = arith.xori %32, %33 : vector<8x8xi1>
    %c0_24 = arith.constant 0 : index
    %c0_25 = arith.constant 0 : index
    %35 = vector.load %arg8[%c0_24, %c0_25] : memref<8x8xf32, #tpu.memory_space<vmem>>, vector<8x8xf32>
    %cst_26 = arith.constant 0.000000e+00 : f32
    %36 = vector.broadcast %cst_26 : f32 to vector<8x8xf32>
    %37 = arith.select %34, %10, %36 : vector<8x8xi1>, vector<8x8xf32>
    %38 = arith.addf %35, %37 : vector<8x8xf32>
    %c0_27 = arith.constant 0 : index
    %c0_28 = arith.constant 0 : index
    %39 = vector.load %arg8[%c0_27, %c0_28] : memref<8x8xf32, #tpu.memory_space<vmem>>, vector<8x8xf32>
    tpu.vector_store %arg8[%c0_27, %c0_28], %38 {strides = array<i32>} : memref<8x8xf32, #tpu.memory_space<vmem>>, vector<8x8xf32>,
    %c8_i32 = arith.constant 8 : i32
    %40 = arith.muli %arg0, %c8_i32 : i32
    %c1_i32_29 = arith.constant 1 : i32
    %41 = arith.addi %arg1, %c1_i32_29 : i32
    %c8_i32_30 = arith.constant 8 : i32
    %42 = arith.muli %41, %c8_i32_30 : i32
    %43 = arith.cmpi slt, %40, %42 : i32
    %c8_i32_31 = arith.constant 8 : i32
    %44 = arith.muli %arg1, %c8_i32_31 : i32
    %c1_i32_32 = arith.constant 1 : i32
    %45 = arith.addi %arg0, %c1_i32_32 : i32
    %c8_i32_33 = arith.constant 8 : i32
    %46 = arith.muli %45, %c8_i32_33 : i32
    %47 = arith.cmpi slt, %44, %46 : i32
    %48 = arith.andi %43, %47 : i1
    %49 = arith.extui %48 : i1 to i32
    %c0_i32_34 = arith.constant 0 : i32
    %50 = arith.cmpi ne, %49, %c0_i32_34 : i32
    scf.if %50 {
      %c8_i32_35 = arith.constant 8 : i32
      %51 = arith.muli %arg0, %c8_i32_35 : i32
      %52 = tpu.iota {dimensions = array<i32: 0>} : vector<8x8xi32>
      %53 = vector.broadcast %51 : i32 to vector<8x8xi32>
      %54 = arith.addi %53, %52 : vector<8x8xi32>
      %c8_i32_36 = arith.constant 8 : i32
      %55 = arith.muli %arg1, %c8_i32_36 : i32
      %56 = tpu.iota {dimensions = array<i32: 1>} : vector<8x8xi32>
      %57 = vector.broadcast %55 : i32 to vector<8x8xi32>
      %58 = arith.addi %57, %56 : vector<8x8xi32>
      %59 = arith.cmpi eq, %54, %58 : vector<8x8xi32>
      %cst_37 = arith.constant 0.000000e+00 : f32
      %60 = vector.broadcast %cst_37 : f32 to vector<8x8xf32>
      %61 = arith.select %59, %10, %60 : vector<8x8xi1>, vector<8x8xf32>
      %c0_38 = arith.constant 0 : index
      %c0_39 = arith.constant 0 : index
      %62 = vector.load %arg6[%c0_38, %c0_39] : memref<8x8xf32, #tpu.memory_space<vmem>>, vector<8x8xf32>
      %63 = arith.subf %62, %61 : vector<8x8xf32>
      %c0_40 = arith.constant 0 : index
      %c0_41 = arith.constant 0 : index
      %64 = vector.load %arg6[%c0_40, %c0_41] : memref<8x8xf32, #tpu.memory_space<vmem>>, vector<8x8xf32>
      tpu.vector_store %arg6[%c0_40, %c0_41], %63 {strides = array<i32>} : memref<8x8xf32, #tpu.memory_space<vmem>>, vector<8x8xf32>,
      %c0_42 = arith.constant 0 : index
      %c0_43 = arith.constant 0 : index
      %65 = vector.load %arg7[%c0_42, %c0_43] : memref<8x8xf32, #tpu.memory_space<vmem>>, vector<8x8xf32>
      %66 = arith.subf %65, %61 : vector<8x8xf32>
      %c0_44 = arith.constant 0 : index
      %c0_45 = arith.constant 0 : index
      %67 = vector.load %arg7[%c0_44, %c0_45] : memref<8x8xf32, #tpu.memory_space<vmem>>, vector<8x8xf32>
      tpu.vector_store %arg7[%c0_44, %c0_45], %66 {strides = array<i32>} : memref<8x8xf32, #tpu.memory_space<vmem>>, vector<8x8xf32>,
    } else {
    }
    return
  }
  func.func @transform_0(%arg0: i32, %arg1: i32) -> (i32, i32) {
    %c0_i32 = arith.constant 0 : i32
    %c0_i32_0 = arith.constant 0 : i32
    return %arg0, %c0_i32 : i32, i32
  }
  func.func @transform_1(%arg0: i32, %arg1: i32) -> (i32, i32) {
    %c0_i32 = arith.constant 0 : i32
    %c0_i32_0 = arith.constant 0 : i32
    return %arg1, %c0_i32 : i32, i32
  }
  func.func @transform_2(%arg0: i32, %arg1: i32) -> (i32, i32) {
    %c0_i32 = arith.constant 0 : i32
    %c0_i32_0 = arith.constant 0 : i32
    return %arg0, %c0_i32 : i32, i32
  }
  func.func @transform_3(%arg0: i32, %arg1: i32) -> (i32, i32) {
    %c0_i32 = arith.constant 0 : i32
    %c0_i32_0 = arith.constant 0 : i32
    return %c0_i32, %arg1 : i32, i32
  }
  func.func @transform_4(%arg0: i32, %arg1: i32) -> (i32, i32) {
    %c0_i32 = arith.constant 0 : i32
    %c0_i32_0 = arith.constant 0 : i32
    return %arg0, %c0_i32 : i32, i32
  }
  func.func @transform_5(%arg0: i32, %arg1: i32) -> (i32, i32) {
    %c0_i32 = arith.constant 0 : i32
    %c0_i32_0 = arith.constant 0 : i32
    return %arg0, %c0_i32 : i32, i32
  }
  func.func @transform_6(%arg0: i32, %arg1: i32) -> (i32, i32) {
    %c0_i32 = arith.constant 0 : i32
    %c0_i32_0 = arith.constant 0 : i32
    return %arg0, %c0_i32 : i32, i32
  }
}

</mosaic_0001>

<llo_original>
// kernel: tpu_custom_call.1
$region0: #{tpu_custom_call.1}
  #allocation0 [shape = 'u32[]', space=smem, size = 0x4, offset = 0x4, fixed_abs, tag = 'smem constant byte address 0x4 - core index']
  #allocation1 [shape = 'u32[72,128]{1,0:T(1,128)}', space=vmem, size = 0x9000, scoped, tag = 'internal scratch']
  %s0 = inlined_call_operand.vmem [shape: bf16[8,32], index: 0, kind: input, shape index: {}]
  %s1 = inlined_call_operand.vmem [shape: bf16[8,32], index: 1, kind: input, shape index: {}]
  %s2 = inlined_call_operand.vmem [shape: s32[8,1], index: 2, kind: input, shape index: {}]
  %s3 = inlined_call_operand.vmem [shape: s32[1,8], index: 3, kind: input, shape index: {}]
  %s4 = inlined_call_operand.hbm [shape: f32[8,8], index: 4, kind: output, shape index: {0}]
  %s5 = inlined_call_operand.hbm [shape: f32[8,8], index: 5, kind: output, shape index: {1}]
  %s6 = inlined_call_operand.hbm [shape: f32[8,8], index: 6, kind: output, shape index: {2}]
  %7 = xla_tuple %s4, %s5, %s6
  %s8 = sld [smem:[#allocation0]]
  $region50: #{tpu_custom_call.1} parent=0
    _
  %s10 = ssub.s32 1, %s8
  %s11 = scalar_select 0, %s10, %s8
  $region1: #{tpu_custom_call.1} parent=0
    #allocation2 [shape = 'u8[4096]{0}', space=vmem, size = 0x1000, scoped, tag = 'output window, operand 0, single buffered']
    #allocation3 [shape = 's32[1]{0}', space=sflag, size = 0x4, scoped, tag = 'scoped memory for tpu_custom_call.1']
    #allocation4 [shape = 'u8[4096]{0}', space=vmem, size = 0x1000, scoped, tag = 'output window, operand 1, single buffered']
    #allocation5 [shape = 's32[1]{0}', space=sflag, size = 0x4, scoped, tag = 'scoped memory for tpu_custom_call.1']
    #allocation6 [shape = 'u8[4096]{0}', space=vmem, size = 0x1000, scoped, tag = 'output window, operand 2, single buffered']
    %12 = vsyncpa [#allocation3], 0
    %13 = vsyncpa [#allocation5], 0
    // Predicated region
    $region2: #{tpu_custom_call.1} parent=1 // pred_check
      _
    $region3: #{tpu_custom_call.1} parent=1 // pred_check_branch
      %15 = sbr.rel (0) target = $region5
    $region4: #{tpu_custom_call.1} parent=1 // pred_region
      _
    $region5: #{tpu_custom_call.1} parent=1 // pred_fallthru
      _
    // Predicated region
    $region6: #{tpu_custom_call.1} parent=1 // pred_check
      _
    $region7: #{tpu_custom_call.1} parent=1 // pred_check_branch
      %17 = sbr.rel (0) target = $region9
    $region8: #{tpu_custom_call.1} parent=1 // pred_region
      _
    $region9: #{tpu_custom_call.1} parent=1 // pred_fallthru
      _
    // Predicated region
    $region10: #{tpu_custom_call.1} parent=1 // pred_check
      _
    $region11: #{tpu_custom_call.1} parent=1 // pred_check_branch
      %19 = sbr.rel (0) target = $region13
    $region12: #{tpu_custom_call.1} parent=1 // pred_region
      _
    $region13: #{tpu_custom_call.1} parent=1 // pred_fallthru
      _
    // Predicated region
    $region14: #{tpu_custom_call.1} parent=1 // pred_check
      _
    $region15: #{tpu_custom_call.1} parent=1 // pred_check_branch
      %21 = sbr.rel (0) target = $region17
    $region16: #{tpu_custom_call.1} parent=1 // pred_region
      _
    $region17: #{tpu_custom_call.1} parent=1 // pred_fallthru
      _
    %p23 = scmp.eq.s32.totalorder 0, 0
    // Predicated region
    $region18: #{tpu_custom_call.1} parent=1 // pred_check
      %p24 = pneg %p23
    $region19: #{tpu_custom_call.1} parent=1 // pred_check_branch
      %26 = sbr.rel (%p24) target = $region21
    $region20: #{tpu_custom_call.1} parent=1 // pred_region
      %vm27 = vcmask 64512
      %28 = vst.msk [vmem:[#allocation2] sm:$0xff] %vm27, 0.0
      %29 = vst.msk [vmem:[#allocation4] sm:$0xff] %vm27, 0.0
      %30 = vst.msk [vmem:[#allocation6] sm:$0xff] %vm27, 0.0
    $region21: #{tpu_custom_call.1} parent=1 // pred_fallthru
      _
    %v31 = vld [vmem:[%s0] sm:$0xf]
    %v32 = vld [vmem:[%s1] sm:$0xf]
    %vm33 = vcmask 261120
    %v35 = vsel %vm33, %v31, 0
    %v38 = vsel %vm33, %v32, 0
    %40 = vmatpush.bf16.xpose.msra.mxu0 0
    %41 = vmatpush.bf16.xpose.msra.mxu0 0
    %42 = vmatpush.bf16.xpose.msra.mxu0 0
    %43 = vmatpush.bf16.xpose.msra.mxu0 0
    %44 = vmatpush.bf16.xpose.msra.mxu0 0
    %45 = vmatpush.bf16.xpose.msra.mxu0 0
    %46 = vmatpush.bf16.xpose.msra.mxu0 0
    %47 = vmatpush.bf16.xpose.msra.mxu0 %v38
    %48 = vmatmul.bf16.gmra.mxu0 %v35
    %v49 = vpop.f32.mrf.mxu0
    %v50 = vadd.f32 0.0, %v49
    %v51 = vpop.f32.mrf.mxu0
    %52 = vdwg.mxu0
    %v53 = vsub.f32 %v50, 1.0
    %v54 = vmul.f32 %v53, 5.0
    %v55 = vmul.f32 %v54, 1.442695
    %v56 = vpow.pop %v55
    %v57 = vld [vmem:[%s2] sm:$0xff]
    %v58 = vld [vmem:[%s3] sm:$0x1]
    %59 = vset.pattern.permute.xlu0 0
    %60 = vperm.xlu0 %59, %v57
    %v61 = vpop.permute.xlu0 %60
    %v62 = vperm.slane %v58, 0
    %vm63 = vcmp.eq.s32.totalorder %v61, %v62
    %v64 = vld [vmem:[#allocation2] sm:$0xff]
    %v65 = vsel %vm63, %v56, 0.0
    %v66 = vadd.f32 %v64, %v65
    %vm67 = vcmask 64512
    %68 = vst.msk [vmem:[#allocation2] sm:$0xff] %vm67, %v66
    %v69 = vld [vmem:[#allocation4] sm:$0xff]
    %v70 = vadd.f32 %v69, %v56
    %71 = vst.msk [vmem:[#allocation4] sm:$0xff] %vm67, %v70
    %v72 = vld [vmem:[%s2] sm:$0xff]
    %vm73 = vcmp.ne.s32.totalorder %v72, 1
    %v74 = vld [vmem:[%s3] sm:$0x1]
    %vm75 = vcmp.ne.s32.totalorder %v74, 1
    %v76 = vsel %vm73, 1, 0
    %77 = vset.pattern.permute.xlu0 0
    %78 = vperm.xlu0 %77, %v76
    %v79 = vpop.permute.xlu0 %78
    %vm80 = vcmp.eq.s32.totalorder %v79, 1
    %v81 = vsel %vm75, 1, 0
    %v82 = vperm.slane %v81, 0
    %vm83 = vcmp.eq.s32.totalorder %v82, 1
    %vm84 = vmxor %vm80, %vm83
    %v85 = vld [vmem:[#allocation6] sm:$0xff]
    %v86 = vsel %vm84, %v56, 0.0
    %v87 = vadd.f32 %v85, %v86
    %88 = vst.msk [vmem:[#allocation6] sm:$0xff] %vm67, %v87
    %s89 = smul.u32 0, 8
    %s90 = sadd.s32 0, 1
    %s91 = smul.u32 %s90, 8
    %p92 = scmp.lt.s32.totalorder %s89, %s91
    %s93 = smul.u32 0, 8
    %s94 = sadd.s32 0, 1
    %s95 = smul.u32 %s94, 8
    %p96 = scmp.lt.s32.totalorder %s93, %s95
    %p97 = pnand %p92, %p96
    %p98 = pneg %p97
    // Predicated region
    $region22: #{tpu_custom_call.1} parent=1 // pred_check
      _
    $region23: #{tpu_custom_call.1} parent=1 // pred_check_branch
      %100 = sbr.rel (%p97) target = $region25
    $region24: #{tpu_custom_call.1} parent=1 // pred_region
      %v101 = vlaneseq
      %v102 = vshrl.u32 %v101, 7
      %v103 = vstv %s89
      %v104 = vadd.s32 %v103, %v102
      %v105 = vlaneseq
      %v106 = vand.u32 %v105, 127
      %v107 = vstv %s93
      %v108 = vadd.s32 %v107, %v106
      %vm109 = vcmp.eq.s32.totalorder %v104, %v108
      %v110 = vsel %vm109, %v56, 0.0
      %v111 = vld [vmem:[#allocation2] sm:$0xff]
      %v112 = vsub.f32 %v111, %v110
      %113 = vst.msk [vmem:[#allocation2] sm:$0xff] %vm67, %v112
      %v114 = vld [vmem:[#allocation4] sm:$0xff]
      %v115 = vsub.f32 %v114, %v110
      %116 = vst.msk [vmem:[#allocation4] sm:$0xff] %vm67, %v115
    $region25: #{tpu_custom_call.1} parent=1 // pred_fallthru
      _
    // Predicated region
    $region26: #{tpu_custom_call.1} parent=1 // pred_check
      _
    $region27: #{tpu_custom_call.1} parent=1 // pred_check_branch
      %118 = sbr.rel (0) target = $region29
    $region28: #{tpu_custom_call.1} parent=1 // pred_region
      %120 = vsyncadd [#allocation3], 0
      %s122 = sshll.u32 [#allocation2], 4
      %s123 = int_to_ptr.vmem [resolvable:$true] %s122
      %s124 = sshll.u32 %s4, 4
      %s125 = int_to_ptr.hbm [resolvable:$true] %s124
      %127 = dma.vmem_to_hbm [thread:$0]  %s123, 128, %s125, [#allocation3]
    $region29: #{tpu_custom_call.1} parent=1 // pred_fallthru
      _
    // Predicated region
    $region30: #{tpu_custom_call.1} parent=1 // pred_check
      _
    $region31: #{tpu_custom_call.1} parent=1 // pred_check_branch
      %129 = sbr.rel (0) target = $region33
    $region32: #{tpu_custom_call.1} parent=1 // pred_region
      %131 = vsyncadd [#allocation5], 0
      %s133 = sshll.u32 [#allocation4], 4
      %s134 = int_to_ptr.vmem [resolvable:$true] %s133
      %s135 = sshll.u32 %s5, 4
      %s136 = int_to_ptr.hbm [resolvable:$true] %s135
      %138 = dma.vmem_to_hbm [thread:$0]  %s134, 128, %s136, [#allocation5]
    $region33: #{tpu_custom_call.1} parent=1 // pred_fallthru
      _
    // Predicated region
    $region34: #{tpu_custom_call.1} parent=1 // pred_check
      _
    $region35: #{tpu_custom_call.1} parent=1 // pred_check_branch
      %140 = sbr.rel (0) target = $region37
    $region36: #{tpu_custom_call.1} parent=1 // pred_region
      %142 = vsyncadd [#allocation5], 0
      %s144 = sshll.u32 [#allocation6], 4
      %s145 = int_to_ptr.vmem [resolvable:$true] %s144
      %s146 = sshll.u32 %s6, 4
      %s147 = int_to_ptr.hbm [resolvable:$true] %s146
      %149 = dma.vmem_to_hbm [thread:$0]  %s145, 128, %s147, [#allocation5]
    $region37: #{tpu_custom_call.1} parent=1 // pred_fallthru
      _
    // Predicated region
    $region38: #{tpu_custom_call.1} parent=1 // pred_check
      _
    $region39: #{tpu_custom_call.1} parent=1 // pred_check_branch
      %151 = sbr.rel (0) target = $region41
    $region40: #{tpu_custom_call.1} parent=1 // pred_region
      %153 = dma.done [#allocation3], 128
    $region41: #{tpu_custom_call.1} parent=1 // pred_fallthru
      _
    // Predicated region
    $region42: #{tpu_custom_call.1} parent=1 // pred_check
      _
    $region43: #{tpu_custom_call.1} parent=1 // pred_check_branch
      %155 = sbr.rel (0) target = $region45
    $region44: #{tpu_custom_call.1} parent=1 // pred_region
      %157 = dma.done [#allocation5], 128
    $region45: #{tpu_custom_call.1} parent=1 // pred_fallthru
      _
    // Predicated region
    $region46: #{tpu_custom_call.1} parent=1 // pred_check
      _
    $region47: #{tpu_custom_call.1} parent=1 // pred_check_branch
      %159 = sbr.rel (0) target = $region49
    $region48: #{tpu_custom_call.1} parent=1 // pred_region
      %161 = dma.done [#allocation5], 128
    $region49: #{tpu_custom_call.1} parent=1 // pred_fallthru
      _
    %162 = vsyncpa [#allocation3], 1
    %163 = vsyncpa [#allocation5], 1

</llo_original>
